<compile_context>
chip_gen: v5e
topology: v5e:2x2
jax: 0.10.0
libtpu: 0.0.40
codegen_flags: <defaults>
</compile_context>

<pallas_src>
import functools
import math

import jax
import jax.numpy as jnp
from jax.experimental import pallas as pl
from jax.experimental.pallas import tpu as pltpu

_INV_SQRT2 = 0.7071067811865476
_EPS = 1e-5


def mlp_kernel(x_ref, gamma_ref, beta_ref, w1_ref, b1_ref, w2_ref, b2_ref,
               o_ref, xn_ref, acc_ref):
    """One (row-tile, M-chunk) grid step of LayerNorm -> Linear -> GELU -> Linear."""
    k = pl.program_id(1)

    # --- per-row-tile prologue: LayerNorm once, zero the f32 accumulator ---
    @pl.when(k == 0)
    def _():
        x = x_ref[...].astype(jnp.float32)
        mean = jnp.mean(x, axis=-1, keepdims=True)
        centered = x - mean
        var = jnp.mean(centered * centered, axis=-1, keepdims=True)
        xn = centered * jax.lax.rsqrt(var + _EPS)
        xn = xn * gamma_ref[...] + beta_ref[...]
        xn_ref[...] = xn.astype(jnp.bfloat16)          # cached bf16 MXU operand
        acc_ref[...] = jnp.zeros_like(acc_ref)

    # --- Linear 1 chunk (E -> mc): bf16 operands, f32 accumulate on the MXU ---
    h = jnp.dot(xn_ref[...], w1_ref[...],
                preferred_element_type=jnp.float32) + b1_ref[...]

    # exact erf GELU (torch.nn.GELU() default), evaluated per M-chunk so the
    # VPU/EUP work overlaps the adjacent chunks' MXU matmuls.
    h = 0.5 * h * (1.0 + jax.lax.erf(h * _INV_SQRT2))

    # (Dropout = identity in eval mode)

    # --- Linear 2 chunk (mc -> E): accumulate into the resident f32 tile ---
    acc_ref[...] += jnp.dot(h.astype(jnp.bfloat16), w2_ref[...],
                            preferred_element_type=jnp.float32)

    # --- per-row-tile epilogue: add b2, cast, emit the lane-dense output tile ---
    @pl.when(k == pl.num_programs(1) - 1)
    def _():
        o_ref[...] = (acc_ref[...] + b2_ref[...]).astype(o_ref.dtype)


def _round_up(n, m):
    return ((n + m - 1) // m) * m


def _choose_row_tile(rows, sub, cap):
    """Row tile: multiple of `sub`, <= cap, minimal zero-row padding, >=2 tiles if possible."""
    cap = max(sub, min(cap, _round_up(rows, sub)))
    cap = (cap // sub) * sub
    floor = max(sub, min(cap, 128))          # avoid degenerate 8-row tiles on big inputs
    best_rt, best_rows_p = cap, _round_up(rows, cap)
    for rt in range(floor, cap + 1, sub):
        rows_p = _round_up(rows, rt)
        if rows_p < best_rows_p or (rows_p == best_rows_p and rt > best_rt):
            best_rt, best_rows_p = rt, rows_p
    # v7x has 2 TensorCores: prefer >= 2 row tiles so the "parallel" axis feeds both.
    if best_rows_p // best_rt < 2 and best_rt >= 2 * sub:
        half = (best_rt // 2 // sub) * sub
        if half >= sub:
            best_rt = half
            best_rows_p = _round_up(rows, best_rt)
    return best_rt, best_rows_p


def _choose_m_chunk(M, cap):
    """Largest multiple of 128 that divides M and is <= cap (fallback: full M)."""
    if M % 128 != 0:
        return M
    mc = 0
    for cand in range(128, min(cap, M) + 1, 128):
        if M % cand == 0:
            mc = cand
    return mc if mc else M


def _vmem_cap_bytes():
    # Generation-aware cap: ~80% of physical VMEM (128 MiB on v5e/v6e, 64 MiB on v7x),
    # leaving headroom for Mosaic internal scratch, semaphores and the pipeline buffers.
    try:
        cap = int(pltpu.get_tpu_info().vmem_capacity_bytes)
        return max(32 << 20, int(cap * 0.8))
    except Exception:
        return 48 << 20   # conservative default, safe on every generation


def _make_spec(shape, index_map, *, single_buffer):
    """BlockSpec; grid-invariant operands are single-buffered to halve VMEM residency."""
    if single_buffer:
        try:
            return pl.BlockSpec(shape, index_map, pipeline_mode=pl.Buffered(1))
        except TypeError:
            pass  # older jax without pipeline_mode: fall back to the default
    return pl.BlockSpec(shape, index_map)


@functools.partial(jax.jit, static_argnames=("row_tile", "hidden_tile"))
def mlp_forward(x, gamma, beta, w1, b1, w2, b2, *, row_tile=512, hidden_tile=1024):
    """x: (B, S, E) -> (B, S, E). Fused LayerNorm -> Linear -> GELU -> Linear."""
    B, S, E = x.shape
    M = w1.shape[1]
    rows = B * S

    # Sublane granularity: 8 rows for f32 inputs, 16 for bf16 (sublane packing).
    sub = 16 if x.dtype == jnp.bfloat16 else 8
    rt, rows_p = _choose_row_tile(rows, sub, row_tile)
    mc = _choose_m_chunk(M, hidden_tile)
    n_k = M // mc

    x2 = x.reshape(rows, E)
    if rows_p != rows:
        # Zero-pad the row (token) axis; padded rows are sliced off after the call.
        x2 = jnp.pad(x2, ((0, rows_p - rows), (0, 0)))

    gamma2 = gamma.reshape(1, E).astype(jnp.float32)
    beta2 = beta.reshape(1, E).astype(jnp.float32)
    w1_bf = w1.astype(jnp.bfloat16)
    w2_bf = w2.astype(jnp.bfloat16)
    b1_2 = b1.reshape(1, M).astype(jnp.float32)
    b2_2 = b2.reshape(1, E).astype(jnp.float32)

    grid = (rows_p // rt, n_k)

    # --- VMEM plan (honest estimate + generation-aware cap) ---
    in_item = x2.dtype.itemsize
    out_item = x.dtype.itemsize
    w_bufs = 1 if n_k == 1 else 2            # weight chunks streamed only when chunked
    vmem_est = (
        2 * rt * E * in_item                  # x tiles (double-buffered)
        + 2 * rt * E * out_item               # out tiles (double-buffered)
        + w_bufs * 2 * (E * mc + mc * E)      # bf16 weight chunks
        + w_bufs * 4 * mc                     # b1 chunk (f32)
        + 4 * 3 * E                           # gamma / beta / b2 (single-buffered)
        + rt * E * (2 + 4)                    # xn bf16 + acc f32 scratch
        + 8 * rt * mc                         # live f32/bf16 h intermediates (rough)
    )
    vmem_limit = int(min(int(vmem_est * 1.5) + (4 << 20), _vmem_cap_bytes()))

    flops = 4 * rows_p * E * M                # two matmuls, 2*R*E*M each
    bytes_accessed = (
        rows_p * E * (in_item + out_item)                 # x in + out
        + (rows_p // rt) * 2 * (E * M + M * E)            # bf16 weights streamed per row tile
        + 4 * (M + 3 * E)                                 # biases / gamma / beta
    )
    cost = pl.CostEstimate(
        flops=flops,
        transcendentals=rows_p * (M + 1),     # erf per hidden element, rsqrt per row
        bytes_accessed=bytes_accessed,
    )

    out2 = pl.pallas_call(
        mlp_kernel,
        out_shape=jax.ShapeDtypeStruct((rows_p, E), x.dtype),
        grid_spec=pltpu.PrefetchScalarGridSpec(
            num_scalar_prefetch=0,
            grid=grid,
            in_specs=[
                pl.BlockSpec((rt, E), lambda i, k: (i, 0)),                    # x row tile
                _make_spec((1, E), lambda i, k: (0, 0), single_buffer=True),   # gamma
                _make_spec((1, E), lambda i, k: (0, 0), single_buffer=True),   # beta
                _make_spec((E, mc), lambda i, k: (0, k), single_buffer=(n_k == 1)),  # w1 chunk
                _make_spec((1, mc), lambda i, k: (0, k), single_buffer=(n_k == 1)),  # b1 chunk
                _make_spec((mc, E), lambda i, k: (k, 0), single_buffer=(n_k == 1)),  # w2 chunk
                _make_spec((1, E), lambda i, k: (0, 0), single_buffer=True),   # b2
            ],
            out_specs=pl.BlockSpec((rt, E), lambda i, k: (i, 0)),
            scratch_shapes=[
                pltpu.VMEM((rt, E), jnp.bfloat16),   # cached LayerNorm output (bf16)
                pltpu.VMEM((rt, E), jnp.float32),    # output accumulator
            ],
        ),
        compiler_params=pltpu.CompilerParams(
            dimension_semantics=("parallel", "arbitrary"),
            vmem_limit_bytes=vmem_limit,
        ),
        cost_estimate=cost,
    )(x2, gamma2, beta2, w1_bf, b1_2, w2_bf, b2_2)

    return out2[:rows].reshape(B, S, E)


def reference_forward(x, gamma, beta, w1, b1, w2, b2):
    """Pure-f32 reference matching the PyTorch module in eval mode."""
    xf = x.astype(jnp.float32)
    mean = jnp.mean(xf, axis=-1, keepdims=True)
    var = jnp.mean((xf - mean) ** 2, axis=-1, keepdims=True)
    xn = (xf - mean) / jnp.sqrt(var + _EPS) * gamma + beta
    h = xn @ w1 + b1
    h = 0.5 * h * (1.0 + jax.lax.erf(h * _INV_SQRT2))
    out = h @ w2 + b2
    return out.astype(x.dtype)


if __name__ == "__main__":
    # Small, lane-dense demo shapes consistent with the module:
    # batch=2, seq=8, embed=128, mlp=256.
    B, S, E, M = 2, 8, 128, 256

    key = jax.random.PRNGKey(0)
    kx, kg, kb, kw1, kb1, kw2, kb2 = jax.random.split(key, 7)

    x = jax.random.normal(kx, (B, S, E), dtype=jnp.float32)

    # Parameter shapes per nn.LayerNorm(E), nn.Linear(E, M), nn.Linear(M, E).
    gamma = 1.0 + 0.1 * jax.random.normal(kg, (E,), jnp.float32)
    beta = 0.1 * jax.random.normal(kb, (E,), jnp.float32)
    w1 = jax.random.uniform(kw1, (E, M), jnp.float32, -1.0, 1.0) / math.sqrt(E)
    b1 = jax.random.uniform(kb1, (M,), jnp.float32, -1.0, 1.0) / math.sqrt(E)
    w2 = jax.random.uniform(kw2, (M, E), jnp.float32, -1.0, 1.0) / math.sqrt(M)
    b2 = jax.random.uniform(kb2, (E,), jnp.float32, -1.0, 1.0) / math.sqrt(M)

    out = jax.block_until_ready(mlp_forward(x, gamma, beta, w1, b1, w2, b2))
    ref = reference_forward(x, gamma, beta, w1, b1, w2, b2)

    assert out.shape == (B, S, E), out.shape
    # Tolerance accounts for bf16 MXU operands (f32 accumulation) vs. the f32 reference.
    max_err = float(jnp.max(jnp.abs(out - ref)))
    assert jnp.allclose(out, ref, atol=5e-2, rtol=5e-2), max_err

    print("KERNEL_OK")
</pallas_src>

<mosaic_0001>
module attributes {stable_mosaic.version = 11 : i64} {
  func.func @mlp_kernel(%arg0: i32, %arg1: i32, %arg2: memref<8x128xf32, #tpu.memory_space<vmem>>, %arg3: memref<1x128xf32, #tpu.memory_space<vmem>>, %arg4: memref<1x128xf32, #tpu.memory_space<vmem>>, %arg5: memref<128x256xbf16, #tpu.memory_space<vmem>>, %arg6: memref<1x256xf32, #tpu.memory_space<vmem>>, %arg7: memref<256x128xbf16, #tpu.memory_space<vmem>>, %arg8: memref<1x128xf32, #tpu.memory_space<vmem>>, %arg9: memref<8x128xf32, #tpu.memory_space<vmem>>, %arg10: memref<8x128xbf16, #tpu.memory_space<vmem>>, %arg11: memref<8x128xf32, #tpu.memory_space<vmem>>) attributes {dimension_semantics = [#tpu.dimension_semantics<parallel>, #tpu.dimension_semantics<arbitrary>], iteration_bounds = array<i64: 2, 1>, scalar_prefetch = 0 : i64, scratch_operands = 2 : i64, tpu.core_type = #tpu.core_type<tc>, window_params = [{transform_indices = @transform_0, window_bounds = array<i64: 8, 128>}, {pipeline_mode = #tpu.pipeline_mode<synchronous>, transform_indices = @transform_1, window_bounds = array<i64: 1, 128>}, {pipeline_mode = #tpu.pipeline_mode<synchronous>, transform_indices = @transform_2, window_bounds = array<i64: 1, 128>}, {pipeline_mode = #tpu.pipeline_mode<synchronous>, transform_indices = @transform_3, window_bounds = array<i64: 128, 256>}, {pipeline_mode = #tpu.pipeline_mode<synchronous>, transform_indices = @transform_4, window_bounds = array<i64: 1, 256>}, {pipeline_mode = #tpu.pipeline_mode<synchronous>, transform_indices = @transform_5, window_bounds = array<i64: 256, 128>}, {pipeline_mode = #tpu.pipeline_mode<synchronous>, transform_indices = @transform_6, window_bounds = array<i64: 1, 128>}, {transform_indices = @transform_7, window_bounds = array<i64: 8, 128>}]} {
    %c0_i32 = arith.constant 0 : i32
    %0 = arith.cmpi eq, %arg1, %c0_i32 : i32
    %1 = arith.extui %0 : i1 to i32
    %c0_i32_0 = arith.constant 0 : i32
    %2 = arith.cmpi ne, %1, %c0_i32_0 : i32
    scf.if %2 {
      %c0_18 = arith.constant 0 : index
      %c0_19 = arith.constant 0 : index
      %26 = vector.load %arg2[%c0_18, %c0_19] : memref<8x128xf32, #tpu.memory_space<vmem>>, vector<8x128xf32>
      %cst_20 = arith.constant dense<0.000000e+00> : vector<8xf32>
      %27 = vector.multi_reduction <add>, %26, %cst_20 [1] : vector<8x128xf32> to vector<8xf32>
      %28 = vector.shape_cast %27 : vector<8xf32> to vector<8x1xf32>
      %cst_21 = arith.constant 1.280000e+02 : f32
      %29 = vector.broadcast %cst_21 : f32 to vector<8x1xf32>
      %30 = arith.divf %28, %29 : vector<8x1xf32>
      %31 = vector.broadcast %30 : vector<8x1xf32> to vector<8x128xf32>
      %32 = arith.subf %26, %31 : vector<8x128xf32>
      %33 = arith.mulf %32, %32 : vector<8x128xf32>
      %cst_22 = arith.constant dense<0.000000e+00> : vector<8xf32>
      %34 = vector.multi_reduction <add>, %33, %cst_22 [1] : vector<8x128xf32> to vector<8xf32>
      %35 = vector.shape_cast %34 : vector<8xf32> to vector<8x1xf32>
      %cst_23 = arith.constant 1.280000e+02 : f32
      %36 = vector.broadcast %cst_23 : f32 to vector<8x1xf32>
      %37 = arith.divf %35, %36 : vector<8x1xf32>
      %cst_24 = arith.constant 9.99999974E-6 : f32
      %38 = vector.broadcast %cst_24 : f32 to vector<8x1xf32>
      %39 = arith.addf %37, %38 : vector<8x1xf32>
      %40 = math.rsqrt %39 : vector<8x1xf32>
      %41 = vector.broadcast %40 : vector<8x1xf32> to vector<8x128xf32>
      %42 = arith.mulf %32, %41 : vector<8x128xf32>
      %c0_25 = arith.constant 0 : index
      %c0_26 = arith.constant 0 : index
      %43 = vector.load %arg3[%c0_25, %c0_26] : memref<1x128xf32, #tpu.memory_space<vmem>>, vector<1x128xf32>
      %44 = vector.broadcast %43 : vector<1x128xf32> to vector<8x128xf32>
      %45 = arith.mulf %42, %44 : vector<8x128xf32>
      %c0_27 = arith.constant 0 : index
      %c0_28 = arith.constant 0 : index
      %46 = vector.load %arg4[%c0_27, %c0_28] : memref<1x128xf32, #tpu.memory_space<vmem>>, vector<1x128xf32>
      %47 = vector.broadcast %46 : vector<1x128xf32> to vector<8x128xf32>
      %48 = arith.addf %45, %47 : vector<8x128xf32>
      %49 = arith.truncf %48 : vector<8x128xf32> to vector<8x128xbf16>
      %c0_29 = arith.constant 0 : index
      %c0_30 = arith.constant 0 : index
      %50 = vector.load %arg10[%c0_29, %c0_30] : memref<8x128xbf16, #tpu.memory_space<vmem>>, vector<8x128xbf16>
      tpu.vector_store %arg10[%c0_29, %c0_30], %49 {strides = array<i32>} : memref<8x128xbf16, #tpu.memory_space<vmem>>, vector<8x128xbf16>,
      %cst_31 = arith.constant 0.000000e+00 : f32
      %51 = vector.broadcast %cst_31 : f32 to vector<8x128xf32>
      %c0_32 = arith.constant 0 : index
      %c0_33 = arith.constant 0 : index
      %52 = vector.load %arg11[%c0_32, %c0_33] : memref<8x128xf32, #tpu.memory_space<vmem>>, vector<8x128xf32>
      tpu.vector_store %arg11[%c0_32, %c0_33], %51 {strides = array<i32>} : memref<8x128xf32, #tpu.memory_space<vmem>>, vector<8x128xf32>,
    } else {
    }
    %c0 = arith.constant 0 : index
    %c0_1 = arith.constant 0 : index
    %3 = vector.load %arg10[%c0, %c0_1] : memref<8x128xbf16, #tpu.memory_space<vmem>>, vector<8x128xbf16>
    %c0_2 = arith.constant 0 : index
    %c0_3 = arith.constant 0 : index
    %4 = vector.load %arg5[%c0_2, %c0_3] : memref<128x256xbf16, #tpu.memory_space<vmem>>, vector<128x256xbf16>
    %cst = arith.constant dense<0.000000e+00> : vector<8x256xf32>
    %5 = tpu.matmul %3, %4, %cst {dimension_numbers = #tpu.dot_dimension_numbers<[1], [0], [0], [1], [0, 0, 1, 1], [], []>} : vector<8x128xbf16>, vector<128x256xbf16>, vector<8x256xf32> -> vector<8x256xf32>
    %c0_4 = arith.constant 0 : index
    %c0_5 = arith.constant 0 : index
    %6 = vector.load %arg6[%c0_4, %c0_5] : memref<1x256xf32, #tpu.memory_space<vmem>>, vector<1x256xf32>
    %7 = vector.broadcast %6 : vector<1x256xf32> to vector<8x256xf32>
    %8 = arith.addf %5, %7 : vector<8x256xf32>
    %cst_6 = arith.constant 5.000000e-01 : f32
    %9 = vector.broadcast %cst_6 : f32 to vector<8x256xf32>
    %10 = arith.mulf %9, %8 : vector<8x256xf32>
    %cst_7 = arith.constant 0.707106769 : f32
    %11 = vector.broadcast %cst_7 : f32 to vector<8x256xf32>
    %12 = arith.mulf %8, %11 : vector<8x256xf32>
    %13 = math.erf %12 : vector<8x256xf32>
    %cst_8 = arith.constant 1.000000e+00 : f32
    %14 = vector.broadcast %cst_8 : f32 to vector<8x256xf32>
    %15 = arith.addf %14, %13 : vector<8x256xf32>
    %16 = arith.mulf %10, %15 : vector<8x256xf32>
    %c0_9 = arith.constant 0 : index
    %c0_10 = arith.constant 0 : index
    %17 = vector.load %arg11[%c0_9, %c0_10] : memref<8x128xf32, #tpu.memory_space<vmem>>, vector<8x128xf32>
    %18 = arith.truncf %16 : vector<8x256xf32> to vector<8x256xbf16>
    %c0_11 = arith.constant 0 : index
    %c0_12 = arith.constant 0 : index
    %19 = vector.load %arg7[%c0_11, %c0_12] : memref<256x128xbf16, #tpu.memory_space<vmem>>, vector<256x128xbf16>
    %cst_13 = arith.constant dense<0.000000e+00> : vector<8x128xf32>
    %20 = tpu.matmul %18, %19, %cst_13 {dimension_numbers = #tpu.dot_dimension_numbers<[1], [0], [0], [1], [0, 0, 1, 1], [], []>} : vector<8x256xbf16>, vector<256x128xbf16>, vector<8x128xf32> -> vector<8x128xf32>
    %21 = arith.addf %17, %20 : vector<8x128xf32>
    %c0_14 = arith.constant 0 : index
    %c0_15 = arith.constant 0 : index
    %22 = vector.load %arg11[%c0_14, %c0_15] : memref<8x128xf32, #tpu.memory_space<vmem>>, vector<8x128xf32>
    tpu.vector_store %arg11[%c0_14, %c0_15], %21 {strides = array<i32>} : memref<8x128xf32, #tpu.memory_space<vmem>>, vector<8x128xf32>,
    %c0_i32_16 = arith.constant 0 : i32
    %23 = arith.cmpi eq, %arg1, %c0_i32_16 : i32
    %24 = arith.extui %23 : i1 to i32
    %c0_i32_17 = arith.constant 0 : i32
    %25 = arith.cmpi ne, %24, %c0_i32_17 : i32
    scf.if %25 {
      %c0_18 = arith.constant 0 : index
      %c0_19 = arith.constant 0 : index
      %26 = vector.load %arg11[%c0_18, %c0_19] : memref<8x128xf32, #tpu.memory_space<vmem>>, vector<8x128xf32>
      %c0_20 = arith.constant 0 : index
      %c0_21 = arith.constant 0 : index
      %27 = vector.load %arg8[%c0_20, %c0_21] : memref<1x128xf32, #tpu.memory_space<vmem>>, vector<1x128xf32>
      %28 = vector.broadcast %27 : vector<1x128xf32> to vector<8x128xf32>
      %29 = arith.addf %26, %28 : vector<8x128xf32>
      %c0_22 = arith.constant 0 : index
      %c0_23 = arith.constant 0 : index
      %30 = vector.load %arg9[%c0_22, %c0_23] : memref<8x128xf32, #tpu.memory_space<vmem>>, vector<8x128xf32>
      tpu.vector_store %arg9[%c0_22, %c0_23], %29 {strides = array<i32>} : memref<8x128xf32, #tpu.memory_space<vmem>>, vector<8x128xf32>,
    } else {
    }
    return
  }
  func.func @transform_0(%arg0: i32, %arg1: i32) -> (i32, i32) {
    %c0_i32 = arith.constant 0 : i32
    %c0_i32_0 = arith.constant 0 : i32
    return %arg0, %c0_i32 : i32, i32
  }
  func.func @transform_1(%arg0: i32, %arg1: i32) -> (i32, i32) {
    %c0_i32 = arith.constant 0 : i32
    %c0_i32_0 = arith.constant 0 : i32
    %c0_i32_1 = arith.constant 0 : i32
    return %c0_i32, %c0_i32_0 : i32, i32
  }
  func.func @transform_2(%arg0: i32, %arg1: i32) -> (i32, i32) {
    %c0_i32 = arith.constant 0 : i32
    %c0_i32_0 = arith.constant 0 : i32
    %c0_i32_1 = arith.constant 0 : i32
    return %c0_i32, %c0_i32_0 : i32, i32
  }
  func.func @transform_3(%arg0: i32, %arg1: i32) -> (i32, i32) {
    %c0_i32 = arith.constant 0 : i32
    %c0_i32_0 = arith.constant 0 : i32
    return %c0_i32, %arg1 : i32, i32
  }
  func.func @transform_4(%arg0: i32, %arg1: i32) -> (i32, i32) {
    %c0_i32 = arith.constant 0 : i32
    %c0_i32_0 = arith.constant 0 : i32
    return %c0_i32, %arg1 : i32, i32
  }
  func.func @transform_5(%arg0: i32, %arg1: i32) -> (i32, i32) {
    %c0_i32 = arith.constant 0 : i32
    %c0_i32_0 = arith.constant 0 : i32
    return %arg1, %c0_i32 : i32, i32
  }
  func.func @transform_6(%arg0: i32, %arg1: i32) -> (i32, i32) {
    %c0_i32 = arith.constant 0 : i32
    %c0_i32_0 = arith.constant 0 : i32
    %c0_i32_1 = arith.constant 0 : i32
    return %c0_i32, %c0_i32_0 : i32, i32
  }
  func.func @transform_7(%arg0: i32, %arg1: i32) -> (i32, i32) {
    %c0_i32 = arith.constant 0 : i32
    %c0_i32_0 = arith.constant 0 : i32
    return %arg0, %c0_i32 : i32, i32
  }
}

</mosaic_0001>

<llo_original>
// kernel: mlp_forward.1
$region0: #{mlp_forward.1}
  #allocation0 [shape = 'u32[]', space=smem, size = 0x4, offset = 0x4, fixed_abs, tag = 'smem constant byte address 0x4 - core index']
  #allocation1 [shape = 'u32[72,128]{1,0:T(1,128)}', space=vmem, size = 0x9000, scoped, tag = 'internal scratch']
  #allocation2 [shape = 'bf16[8,128]{1,0:T(8,128)(2,1)}', space=vmem, size = 0x800, scoped, tag = 'scratch operand']
  #allocation3 [shape = 'f32[8,128]{1,0:T(8,128)}', space=vmem, size = 0x1000, scoped, tag = 'scratch operand']
  %s0 = inlined_call_operand.vmem [shape: f32[16,128], index: 0, kind: input, shape index: {}]
  %s1 = inlined_call_operand.vmem [shape: f32[1,128], index: 1, kind: input, shape index: {}]
  %s2 = inlined_call_operand.vmem [shape: f32[1,128], index: 2, kind: input, shape index: {}]
  %s3 = inlined_call_operand.vmem [shape: bf16[128,256], index: 3, kind: input, shape index: {}]
  %s4 = inlined_call_operand.vmem [shape: f32[1,256], index: 4, kind: input, shape index: {}]
  %s5 = inlined_call_operand.vmem [shape: bf16[256,128], index: 5, kind: input, shape index: {}]
  %s6 = inlined_call_operand.vmem [shape: f32[1,128], index: 6, kind: input, shape index: {}]
  %s7 = inlined_call_operand.hbm [shape: f32[16,128], index: 7, kind: output, shape index: {}]
  %s8 = sld [smem:[#allocation0]]
  $region69: #{mlp_forward.1} parent=0
    _
  %s10 = ssub.s32 1, %s8
  %s11 = scalar_select 0, %s10, %s8
  $region1: #{mlp_forward.1} parent=0
    #allocation4 [shape = 'u8[8192]{0}', space=vmem, size = 0x2000, scoped, tag = 'output window, operand 0']
    #allocation5 [shape = 's32[2]{0}', space=sflag, size = 0x8, scoped, tag = 'scoped memory for mlp_forward.1']
    %12 = vsyncpa [#allocation5], 0
    %s13 = scalar_lea.sflag [#allocation5], 1
    %14 = vsyncpa %s13, 0
    loop: start=0, step=1, limit=4
    $region2: #{mlp_forward.1} parent=1 // loop_pre_header
      _
    $region3: #{mlp_forward.1} parent=1 // loop_header
      %s16 = sphi 0, %s20
      %p17 = scmp.ge.s32.totalorder %s16, 4
      %s23 = sphi 0, %s35
      %s24 = sphi 0, %s31
      %s25 = sphi 0, %s23
      %s26 = sphi 0, %s24
      %s27 = sphi 0, %s25
      %s28 = sphi 0, %s26
      %s38 = sphi 0, %s40
      %s41 = sphi 0, %s38
      %s42 = sphi 0, %s41
      %s58 = sphi 0, %s42
      %s62 = sphi 0, %s62
      %s64 = sphi 0, %s62
      %s65 = sphi 0, %s64
      %s79 = sphi 0, %s65
      %s83 = sphi 0, %s83
      %s85 = sphi 0, %s83
      %s86 = sphi 0, %s85
      %s100 = sphi 0, %s86
      %s106 = sphi 0, %s108
      %s109 = sphi 0, %s106
      %s110 = sphi 0, %s109
      %s126 = sphi 0, %s110
      %s132 = sphi 0, %s134
      %s135 = sphi 0, %s132
      %s136 = sphi 0, %s135
      %s152 = sphi 0, %s136
      %s158 = sphi 0, %s160
      %s161 = sphi 0, %s158
      %s162 = sphi 0, %s161
      %s178 = sphi 0, %s162
      %s182 = sphi 0, %s182
      %s184 = sphi 0, %s182
      %s185 = sphi 0, %s184
      %s199 = sphi 0, %s185
      %s205 = sphi 0, %s207
      %s208 = sphi 0, %s205
      %s209 = sphi 0, %s208
      %s225 = sphi 0, %s209
    $region4: #{mlp_forward.1} parent=1 // loop_header_branch
      %19 = sbr.rel (%p17) target = $region8
    $region5: #{mlp_forward.1} parent=1 // loop_body
      %s21 = ssub.s32 %s16, 1
      %s22 = ssub.s32 %s16, 2
      %s29 = sadd.s32 1, %s24
      %p30 = scmp.ge.s32.totalorder %s29, 1
      %s31 = scalar_select %p30, 0, %s29
      %s32 = sadd.s32 1, %s23
      %s33 = scalar_select %p30, %s32, %s23
      %p34 = scmp.ge.s32.totalorder %s33, 2
      %s35 = scalar_select %p34, 0, %s33
      %s36 = ssub.s32 %s23, %s35
      %p37 = scmp.eq.s32.totalorder %s36, 0
      %s39 = sadd.s32 %s38, 1
      %s40 = scalar_select %p37, %s38, %s39
      %p43 = pneg %p37
      %p44 = scmp.eq.s32.totalorder %s16, 1
      %p45 = por %p43, %p44
      %p46 = scmp.ne.s32.totalorder %s38, %s41
      %p47 = scmp.eq.s32.totalorder %s16, 0
      %p48 = por %p46, %p47
      %p49 = scmp.ne.s32.totalorder %s38, %s41
      %p50 = scmp.eq.s32.totalorder %s21, 1
      %p51 = por %p49, %p50
      %p52 = scmp.ne.s32.totalorder %s41, %s42
      %p53 = scmp.eq.s32.totalorder %s21, 0
      %p54 = por %p52, %p53
      %p55 = scmp.ne.s32.totalorder %s41, %s42
      %p56 = scmp.eq.s32.totalorder %s22, 1
      %p57 = por %p55, %p56
      %p59 = scmp.ne.s32.totalorder %s42, %s58
      %p60 = scmp.eq.s32.totalorder %s22, 0
      %p61 = por %p59, %p60
      %s63 = sadd.s32 %s62, 1
      %p66 = scmp.eq.s32.totalorder %s16, 1
      %p67 = scmp.ne.s32.totalorder %s62, %s64
      %p68 = scmp.eq.s32.totalorder %s16, 0
      %p69 = por %p67, %p68
      %p70 = scmp.ne.s32.totalorder %s62, %s64
      %p71 = scmp.eq.s32.totalorder %s21, 1
      %p72 = por %p70, %p71
      %p73 = scmp.ne.s32.totalorder %s64, %s65
      %p74 = scmp.eq.s32.totalorder %s21, 0
      %p75 = por %p73, %p74
      %p76 = scmp.ne.s32.totalorder %s64, %s65
      %p77 = scmp.eq.s32.totalorder %s22, 1
      %p78 = por %p76, %p77
      %p80 = scmp.ne.s32.totalorder %s65, %s79
      %p81 = scmp.eq.s32.totalorder %s22, 0
      %p82 = por %p80, %p81
      %s84 = sadd.s32 %s83, 1
      %p87 = scmp.eq.s32.totalorder %s16, 1
      %p88 = scmp.ne.s32.totalorder %s83, %s85
      %p89 = scmp.eq.s32.totalorder %s16, 0
      %p90 = por %p88, %p89
      %p91 = scmp.ne.s32.totalorder %s83, %s85
      %p92 = scmp.eq.s32.totalorder %s21, 1
      %p93 = por %p91, %p92
      %p94 = scmp.ne.s32.totalorder %s85, %s86
      %p95 = scmp.eq.s32.totalorder %s21, 0
      %p96 = por %p94, %p95
      %p97 = scmp.ne.s32.totalorder %s85, %s86
      %p98 = scmp.eq.s32.totalorder %s22, 1
      %p99 = por %p97, %p98
      %p101 = scmp.ne.s32.totalorder %s86, %s100
      %p102 = scmp.eq.s32.totalorder %s22, 0
      %p103 = por %p101, %p102
      %s104 = ssub.s32 %s24, %s31
      %p105 = scmp.eq.s32.totalorder %s104, 0
      %s107 = sadd.s32 %s106, 1
      %s108 = scalar_select %p105, %s106, %s107
      %p111 = pneg %p105
      %p112 = scmp.eq.s32.totalorder %s16, 1
      %p113 = por %p111, %p112
      %p114 = scmp.ne.s32.totalorder %s106, %s109
      %p115 = scmp.eq.s32.totalorder %s16, 0
      %p116 = por %p114, %p115
      %p117 = scmp.ne.s32.totalorder %s106, %s109
      %p118 = scmp.eq.s32.totalorder %s21, 1
      %p119 = por %p117, %p118
      %p120 = scmp.ne.s32.totalorder %s109, %s110
      %p121 = scmp.eq.s32.totalorder %s21, 0
      %p122 = por %p120, %p121
      %p123 = scmp.ne.s32.totalorder %s109, %s110
      %p124 = scmp.eq.s32.totalorder %s22, 1
      %p125 = por %p123, %p124
      %p127 = scmp.ne.s32.totalorder %s110, %s126
      %p128 = scmp.eq.s32.totalorder %s22, 0
      %p129 = por %p127, %p128
      %s130 = ssub.s32 %s24, %s31
      %p131 = scmp.eq.s32.totalorder %s130, 0
      %s133 = sadd.s32 %s132, 1
      %s134 = scalar_select %p131, %s132, %s133
      %p137 = pneg %p131
      %p138 = scmp.eq.s32.totalorder %s16, 1
      %p139 = por %p137, %p138
      %p140 = scmp.ne.s32.totalorder %s132, %s135
      %p141 = scmp.eq.s32.totalorder %s16, 0
      %p142 = por %p140, %p141
      %p143 = scmp.ne.s32.totalorder %s132, %s135
      %p144 = scmp.eq.s32.totalorder %s21, 1
      %p145 = por %p143, %p144
      %p146 = scmp.ne.s32.totalorder %s135, %s136
      %p147 = scmp.eq.s32.totalorder %s21, 0
      %p148 = por %p146, %p147
      %p149 = scmp.ne.s32.totalorder %s135, %s136
      %p150 = scmp.eq.s32.totalorder %s22, 1
      %p151 = por %p149, %p150
      %p153 = scmp.ne.s32.totalorder %s136, %s152
      %p154 = scmp.eq.s32.totalorder %s22, 0
      %p155 = por %p153, %p154
      %s156 = ssub.s32 %s24, %s31
      %p157 = scmp.eq.s32.totalorder %s156, 0
      %s159 = sadd.s32 %s158, 1
      %s160 = scalar_select %p157, %s158, %s159
      %p163 = pneg %p157
      %p164 = scmp.eq.s32.totalorder %s16, 1
      %p165 = por %p163, %p164
      %p166 = scmp.ne.s32.totalorder %s158, %s161
      %p167 = scmp.eq.s32.totalorder %s16, 0
      %p168 = por %p166, %p167
      %p169 = scmp.ne.s32.totalorder %s158, %s161
      %p170 = scmp.eq.s32.totalorder %s21, 1
      %p171 = por %p169, %p170
      %p172 = scmp.ne.s32.totalorder %s161, %s162
      %p173 = scmp.eq.s32.totalorder %s21, 0
      %p174 = por %p172, %p173
      %p175 = scmp.ne.s32.totalorder %s161, %s162
      %p176 = scmp.eq.s32.totalorder %s22, 1
      %p177 = por %p175, %p176
      %p179 = scmp.ne.s32.totalorder %s162, %s178
      %p180 = scmp.eq.s32.totalorder %s22, 0
      %p181 = por %p179, %p180
      %s183 = sadd.s32 %s182, 1
      %p186 = scmp.eq.s32.totalorder %s16, 1
      %p187 = scmp.ne.s32.totalorder %s182, %s184
      %p188 = scmp.eq.s32.totalorder %s16, 0
      %p189 = por %p187, %p188
      %p190 = scmp.ne.s32.totalorder %s182, %s184
      %p191 = scmp.eq.s32.totalorder %s21, 1
      %p192 = por %p190, %p191
      %p193 = scmp.ne.s32.totalorder %s184, %s185
      %p194 = scmp.eq.s32.totalorder %s21, 0
      %p195 = por %p193, %p194
      %p196 = scmp.ne.s32.totalorder %s184, %s185
      %p197 = scmp.eq.s32.totalorder %s22, 1
      %p198 = por %p196, %p197
      %p200 = scmp.ne.s32.totalorder %s185, %s199
      %p201 = scmp.eq.s32.totalorder %s22, 0
      %p202 = por %p200, %p201
      %s203 = ssub.s32 %s23, %s35
      %p204 = scmp.eq.s32.totalorder %s203, 0
      %s206 = sadd.s32 %s205, 1
      %s207 = scalar_select %p204, %s205, %s206
      %p210 = pneg %p204
      %p211 = scmp.eq.s32.totalorder %s16, 1
      %p212 = por %p210, %p211
      %p213 = scmp.ne.s32.totalorder %s205, %s208
      %p214 = scmp.eq.s32.totalorder %s16, 0
      %p215 = por %p213, %p214
      %p216 = scmp.ne.s32.totalorder %s205, %s208
      %p217 = scmp.eq.s32.totalorder %s21, 1
      %p218 = por %p216, %p217
      %p219 = scmp.ne.s32.totalorder %s208, %s209
      %p220 = scmp.eq.s32.totalorder %s21, 0
      %p221 = por %p219, %p220
      %p222 = scmp.ne.s32.totalorder %s208, %s209
      %p223 = scmp.eq.s32.totalorder %s22, 1
      %p224 = por %p222, %p223
      %p226 = scmp.ne.s32.totalorder %s209, %s225
      %p227 = scmp.eq.s32.totalorder %s22, 0
      %p228 = por %p226, %p227
      %p229 = scmp.le.s32.totalorder 1, %s16
      %p230 = scmp.lt.s32.totalorder %s16, 3
      %p231 = pnand %p229, %p230
      %p232 = pneg %p231
      // Predicated region
      $region9: #{mlp_forward.1} parent=5 // pred_check
        _
      $region10: #{mlp_forward.1} parent=5 // pred_check_branch
        %234 = sbr.rel (%p231) target = $region12
      $region11: #{mlp_forward.1} parent=5 // pred_region
        %s235 = ssub.s32 %s16, 1
        // Predicated region
        $region13: #{mlp_forward.1} parent=11 // pred_check
          %p236 = pneg %p75
        $region14: #{mlp_forward.1} parent=11 // pred_check_branch
          %238 = sbr.rel (%p236) target = $region16
        $region15: #{mlp_forward.1} parent=11 // pred_region
          _
        $region16: #{mlp_forward.1} parent=11 // pred_fallthru
          _
        // Predicated region
        $region17: #{mlp_forward.1} parent=11 // pred_check
          %p239 = pneg %p96
        $region18: #{mlp_forward.1} parent=11 // pred_check_branch
          %241 = sbr.rel (%p239) target = $region20
        $region19: #{mlp_forward.1} parent=11 // pred_region
          _
        $region20: #{mlp_forward.1} parent=11 // pred_fallthru
          _
        // Predicated region
        $region21: #{mlp_forward.1} parent=11 // pred_check
          %p242 = pneg %p122
        $region22: #{mlp_forward.1} parent=11 // pred_check_branch
          %244 = sbr.rel (%p242) target = $region24
        $region23: #{mlp_forward.1} parent=11 // pred_region
          %s245 = smul.u32 2, %s26
          %p246 = scmp.lt.s32.totalorder %s245, 1
          %s247 = scalar_select %p246, %s245, 1
          %s248 = smul.addr %s247, 4
          %s249 = scalar_lea.vmem %s3, %s248
          %s250 = smul.u32 2, %s26
        $region24: #{mlp_forward.1} parent=11 // pred_fallthru
          _
        // Predicated region
        $region25: #{mlp_forward.1} parent=11 // pred_check
          %p251 = pneg %p148
        $region26: #{mlp_forward.1} parent=11 // pred_check_branch
          %253 = sbr.rel (%p251) target = $region28
        $region27: #{mlp_forward.1} parent=11 // pred_region
          %s254 = smul.u32 2, %s26
          %p255 = scmp.lt.s32.totalorder %s254, 1
          %s256 = scalar_select %p255, %s254, 1
          %s257 = scalar_lea.vmem %s4, %s256
          %s258 = smul.u32 2, %s26
        $region28: #{mlp_forward.1} parent=11 // pred_fallthru
          _
        // Predicated region
        $region29: #{mlp_forward.1} parent=11 // pred_check
          %p259 = pneg %p174
        $region30: #{mlp_forward.1} parent=11 // pred_check_branch
          %261 = sbr.rel (%p259) target = $region32
        $region31: #{mlp_forward.1} parent=11 // pred_region
          %s262 = smul.u32 32, %s26
          %p263 = scmp.lt.s32.totalorder %s262, 31
          %s264 = scalar_select %p263, %s262, 31
          %s265 = smul.addr %s264, 4
          %s266 = scalar_lea.vmem %s5, %s265
          %s267 = smul.u32 32, %s26
        $region32: #{mlp_forward.1} parent=11 // pred_fallthru
          _
        // Predicated region
        $region33: #{mlp_forward.1} parent=11 // pred_check
          %p268 = pneg %p195
        $region34: #{mlp_forward.1} parent=11 // pred_check_branch
          %270 = sbr.rel (%p268) target = $region36
        $region35: #{mlp_forward.1} parent=11 // pred_region
          _
        $region36: #{mlp_forward.1} parent=11 // pred_fallthru
          _
      $region12: #{mlp_forward.1} parent=5 // pred_fallthru
        _
      %p271 = scmp.lt.s32.totalorder %s16, 2
      // Predicated region
      $region37: #{mlp_forward.1} parent=5 // pred_check
        %p272 = pneg %p271
      $region38: #{mlp_forward.1} parent=5 // pred_check_branch
        %274 = sbr.rel (%p272) target = $region40
      $region39: #{mlp_forward.1} parent=5 // pred_region
        // Predicated region
        $region41: #{mlp_forward.1} parent=39 // pred_check
          %p275 = pneg %p48
        $region42: #{mlp_forward.1} parent=39 // pred_check_branch
          %277 = sbr.rel (%p275) target = $region44
        $region43: #{mlp_forward.1} parent=39 // pred_region
          %p278 = scmp.lt.s32.totalorder %s23, 1
          %s279 = scalar_select %p278, %s23, 1
          %s280 = smul.addr %s279, 8
          %s281 = scalar_lea.vmem %s0, %s280
        $region44: #{mlp_forward.1} parent=39 // pred_fallthru
          _
      $region40: #{mlp_forward.1} parent=5 // pred_fallthru
        _
      %p282 = scmp.le.s32.totalorder 1, %s16
      %p283 = scmp.lt.s32.totalorder %s16, 3
      %p284 = pnand %p282, %p283
      %p285 = pneg %p284
      // Predicated region
      $region45: #{mlp_forward.1} parent=5 // pred_check
        _
      $region46: #{mlp_forward.1} parent=5 // pred_check_branch
        %287 = sbr.rel (%p284) target = $region48
      $region47: #{mlp_forward.1} parent=5 // pred_region
        %s288 = ssub.s32 %s16, 1
        %p289 = scmp.lt.s32.totalorder %s25, 1
        %s290 = scalar_select %p289, %s25, 1
        %s291 = smul.addr %s290, 8
        %s292 = scalar_lea.vmem %s0, %s291
        %p293 = pneg %p54
        %p294 = pneg %p51
        %p295 = pneg %p75
        %p296 = pneg %p72
        %p297 = pneg %p96
        %p298 = pneg %p93
        %s299 = smul.u32 2, %s26
        %p300 = scmp.lt.s32.totalorder %s299, 1
        %s301 = scalar_select %p300, %s299, 1
        %s302 = smul.addr %s301, 4
        %s303 = scalar_lea.vmem %s3, %s302
        %p304 = pneg %p122
        %p305 = pneg %p119
        %s306 = smul.u32 2, %s26
        %p307 = scmp.lt.s32.totalorder %s306, 1
        %s308 = scalar_select %p307, %s306, 1
        %s309 = scalar_lea.vmem %s4, %s308
        %p310 = pneg %p148
        %p311 = pneg %p145
        %s312 = smul.u32 32, %s26
        %p313 = scmp.lt.s32.totalorder %s312, 31
        %s314 = scalar_select %p313, %s312, 31
        %s315 = smul.addr %s314, 4
        %s316 = scalar_lea.vmem %s5, %s315
        %p317 = pneg %p174
        %p318 = pneg %p171
        %p319 = pneg %p195
        %p320 = pneg %p192
        %p321 = pneg %p221
        %p322 = pneg %p218
        %s323 = sand.u32 %s208, 1
        %s324 = scalar_lea.sflag [#allocation5], %s323
        %s325 = sand.u32 %s208, 1
        %s326 = smul.addr %s325, 8
        %s327 = scalar_lea.vmem [#allocation4], %s326
        %p328 = scmp.lt.s32.totalorder %s25, 1
        %s329 = scalar_select %p328, %s25, 1
        %s330 = smul.addr %s329, 8
        %s331 = scalar_lea.vmem %s0, %s330
        %s332 = smul.u32 2, %s26
        %p333 = scmp.lt.s32.totalorder %s332, 1
        %s334 = scalar_select %p333, %s332, 1
        %s335 = smul.addr %s334, 4
        %s336 = scalar_lea.vmem %s3, %s335
        %s337 = smul.u32 2, %s26
        %s338 = smul.u32 2, %s26
        %p339 = scmp.lt.s32.totalorder %s338, 1
        %s340 = scalar_select %p339, %s338, 1
        %s341 = scalar_lea.vmem %s4, %s340
        %s342 = smul.u32 2, %s26
        %s343 = smul.u32 32, %s26
        %p344 = scmp.lt.s32.totalorder %s343, 31
        %s345 = scalar_select %p344, %s343, 31
        %s346 = smul.addr %s345, 4
        %s347 = scalar_lea.vmem %s5, %s346
        %s348 = smul.u32 32, %s26
        %p349 = scmp.eq.s32.totalorder %s26, 0
        // Predicated region
        $region49: #{mlp_forward.1} parent=47 // pred_check
          %p350 = pneg %p349
        $region50: #{mlp_forward.1} parent=47 // pred_check_branch
          %352 = sbr.rel (%p350) target = $region52
        $region51: #{mlp_forward.1} parent=47 // pred_region
          %v353 = vld [vmem:[%s331] sm:$0xff]
          %354 = vadd.xlane.f32.xlu0 %v353
          %v355 = vpop.xlane.xlu0 %354
          %v356 = vrcp.pop 128.0
          %v357 = vmul.f32 128.0, %v356
          %v358 = vsub.f32 1.0, %v357
          %v359 = vmul.f32 %v356, %v358
          %v360 = vadd.f32 %v356, %v359
          %vm361 = vweird.f32 %v356
          %v362 = vsel %vm361, %v356, %v360
          %v363 = vmul.f32 %v355, %v362
          %v364 = vsub.f32 %v353, %v363
          %v365 = vmul.f32 %v364, %v364
          %366 = vadd.xlane.f32.xlu0 %v365
          %v367 = vpop.xlane.xlu0 %366
          %v368 = vmul.f32 %v367, %v362
          %v369 = vadd.f32 %v368, 1e-05
          %v370 = vrsqrt.pop %v369
          %v371 = vmul.f32 %v370, %v369
          %v372 = vmul.f32 %v371, %v370
          %v373 = vmul.f32 0.5, %v372
          %v374 = vsub.f32 1.5, %v373
          %v375 = vmul.f32 %v370, %v374
          %vm376 = vweird.f32 %v369
          %vm377 = vweird.f32 %v370
          %vm378 = vmor %vm376, %vm377
          %v379 = vsel %vm378, %v370, %v375
          %v380 = vmul.f32 %v364, %v379
          %v381 = vld [vmem:[%s1] sm:$0x1]
          %v383 = vperm.slane %v381, 0
          %v385 = vmul.f32 %v380, %v383
          %v386 = vld [vmem:[%s2] sm:$0x1]
          %v388 = vperm.slane %v386, 0
          %v390 = vadd.f32 %v385, %v388
          %v391 = vpack.c.bf16 %v390, %v390
          %392 = vst [vmem:[#allocation2] sm:$0xf] %v391
          %393 = vst [vmem:[#allocation3] sm:$0xff] 0.0
        $region52: #{mlp_forward.1} parent=47 // pred_fallthru
          _
        %v394 = vld [vmem:[#allocation2] sm:$0xf]
        %v395 = vld [vmem:[%s336] sm:$0xff]
        %v396 = vld [vmem:[%s336 + $0x8] sm:$0xff]
        %v397 = vld [vmem:[%s336 + $0x10] sm:$0xff]
        %v398 = vld [vmem:[%s336 + $0x18] sm:$0xff]
        %v399 = vld [vmem:[%s336 + $0x20] sm:$0xff]
        %v400 = vld [vmem:[%s336 + $0x28] sm:$0xff]
        %v401 = vld [vmem:[%s336 + $0x30] sm:$0xff]
        %v402 = vld [vmem:[%s336 + $0x38] sm:$0xff]
        %v403 = vld [vmem:[%s336 + $0x40] sm:$0xff]
        %v404 = vld [vmem:[%s336 + $0x48] sm:$0xff]
        %v405 = vld [vmem:[%s336 + $0x50] sm:$0xff]
        %v406 = vld [vmem:[%s336 + $0x58] sm:$0xff]
        %v407 = vld [vmem:[%s336 + $0x60] sm:$0xff]
        %v408 = vld [vmem:[%s336 + $0x68] sm:$0xff]
        %v409 = vld [vmem:[%s336 + $0x70] sm:$0xff]
        %v410 = vld [vmem:[%s336 + $0x78] sm:$0xff]
        %v411 = vld [vmem:[%s341] sm:$0x3]
        %v413 = vperm.slane %v411, 0
        %v414 = vperm.slane %v411, 1
        %v433 = vunpack.c.l.b16 %v395
        %v434 = vunpack.c.h.b16 %v395
        %v435 = vunpack.c.l.b16 %v396
        %v436 = vunpack.c.h.b16 %v396
        %v437 = vunpack.c.l.b16 %v397
        %v438 = vunpack.c.h.b16 %v397
        %v439 = vunpack.c.l.b16 %v398
        %v440 = vunpack.c.h.b16 %v398
        %v441 = vunpack.c.l.b16 %v399
        %v442 = vunpack.c.h.b16 %v399
        %v443 = vunpack.c.l.b16 %v400
        %v444 = vunpack.c.h.b16 %v400
        %v445 = vunpack.c.l.b16 %v401
        %v446 = vunpack.c.h.b16 %v401
        %v447 = vunpack.c.l.b16 %v402
        %v448 = vunpack.c.h.b16 %v402
        %v449 = vunpack.c.l.b16 %v403
        %v450 = vunpack.c.h.b16 %v403
        %v451 = vunpack.c.l.b16 %v404
        %v452 = vunpack.c.h.b16 %v404
        %v453 = vunpack.c.l.b16 %v405
        %v454 = vunpack.c.h.b16 %v405
        %v455 = vunpack.c.l.b16 %v406
        %v456 = vunpack.c.h.b16 %v406
        %v457 = vunpack.c.l.b16 %v407
        %v458 = vunpack.c.h.b16 %v407
        %v459 = vunpack.c.l.b16 %v408
        %v460 = vunpack.c.h.b16 %v408
        %v461 = vunpack.c.l.b16 %v409
        %v462 = vunpack.c.h.b16 %v409
        %v463 = vunpack.c.l.b16 %v410
        %v464 = vunpack.c.h.b16 %v410
        %v465 = vpack.c.b16 %v435, %v433
        %v466 = vpack.c.b16 %v436, %v434
        %v467 = vpack.c.b16 %v439, %v437
        %v468 = vpack.c.b16 %v440, %v438
        %v469 = vpack.c.b16 %v443, %v441
        %v470 = vpack.c.b16 %v444, %v442
        %v471 = vpack.c.b16 %v447, %v445
        %v472 = vpack.c.b16 %v448, %v446
        %v473 = vpack.c.b16 %v451, %v449
        %v474 = vpack.c.b16 %v452, %v450
        %v475 = vpack.c.b16 %v455, %v453
        %v476 = vpack.c.b16 %v456, %v454
        %v477 = vpack.c.b16 %v459, %v457
        %v478 = vpack.c.b16 %v460, %v458
        %v479 = vpack.c.b16 %v463, %v461
        %v480 = vpack.c.b16 %v464, %v462
        %497 = vmatpush.bf16.msra.mxu0 %v479
        %498 = vmatpush.bf16.msra.mxu0 %v477
        %499 = vmatpush.bf16.msra.mxu0 %v475
        %500 = vmatpush.bf16.msra.mxu0 %v473
        %501 = vmatpush.bf16.msra.mxu0 %v471
        %502 = vmatpush.bf16.msra.mxu0 %v469
        %503 = vmatpush.bf16.msra.mxu0 %v467
        %504 = vmatpush.bf16.msra.mxu0 %v465
        %505 = vmatmul.bf16.gmra.mxu0 %v394
        %v506 = vpop.f32.mrf.mxu0
        %v507 = vadd.f32 %v413, %v506
        %v508 = vpop.f32.mrf.mxu0
        %509 = vdwg.mxu0
        %510 = vmatpush.bf16.msra.mxu0 %v480
        %511 = vmatpush.bf16.msra.mxu0 %v478
        %512 = vmatpush.bf16.msra.mxu0 %v476
        %513 = vmatpush.bf16.msra.mxu0 %v474
        %514 = vmatpush.bf16.msra.mxu0 %v472
        %515 = vmatpush.bf16.msra.mxu0 %v470
        %516 = vmatpush.bf16.msra.mxu0 %v468
        %517 = vmatpush.bf16.msra.mxu0 %v466
        %518 = vmatmul.bf16.gmra.mxu0 %v394
        %v519 = vpop.f32.mrf.mxu0
        %v520 = vadd.f32 %v414, %v519
        %v521 = vpop.f32.mrf.mxu0
        %522 = vdwg.mxu0
        %v523 = vmul.f32 %v507, 0.5
        %v524 = vmul.f32 %v520, 0.5
        %v525 = vmul.f32 %v507, 0.70710677
        %v526 = vmul.f32 %v520, 0.70710677
        %v527 = vmul.f32 %v525, %v525
        %v528 = vmin.f32 16.0, %v527
        %v529 = vmul.f32 %v528, 2.1237322e-06
        %v530 = vadd.f32 %v529, 0.00028619796
        %v531 = vmul.f32 %v528, %v530
        %v532 = vadd.f32 %v531, 0.0036580483
        %v533 = vmul.f32 %v528, %v532
        %v534 = vadd.f32 %v533, 0.05243302
        %v535 = vmul.f32 %v528, %v534
        %v536 = vadd.f32 %v535, 0.18741608
        %v537 = vmul.f32 %v528, %v536
        %v538 = vadd.f32 %v537, 1.1283791
        %v539 = vmul.f32 %v525, %v538
        %v540 = vmul.f32 %v528, 3.8918573e-05
        %v541 = vadd.f32 %v540, 0.001143296
        %v542 = vmul.f32 %v528, %v541
        %v543 = vadd.f32 %v542, 0.014752088
        %v544 = vmul.f32 %v528, %v543
        %v545 = vadd.f32 %v544, 0.112945676
        %v546 = vmul.f32 %v528, %v545
        %v547 = vadd.f32 %v546, 0.4994258
        %v548 = vmul.f32 %v528, %v547
        %v549 = vadd.f32 %v548, 1.0
        %v550 = vrcp.pop %v549
        %v551 = vmul.f32 %v549, %v550
        %v552 = vsub.f32 1.0, %v551
        %v553 = vmul.f32 %v550, %v552
        %v554 = vadd.f32 %v550, %v553
        %vm555 = vweird.f32 %v549
        %vm556 = vweird.f32 %v550
        %vm557 = vmor %vm555, %vm556
        %v558 = vsel %vm557, %v550, %v554
        %v559 = vand.u32 2147483647, %v549
        %vm560 = vcmp.eq.f32.partialorder %v559, 8.507059e+37
        %v561 = vand.u32 %v549, 2147483648
        %v562 = vor.u32 1.1754944e-38, %v561
        %v563 = vsel %vm560, %v562, %v558
        %v564 = vmul.f32 %v539, %v563
        %v565 = vmin.f32 %v564, 1.0
        %v566 = vmax.f32 %v565, -1.0
        %v567 = vmul.f32 %v526, %v526
        %v568 = vmin.f32 16.0, %v567
        %v569 = vmul.f32 %v568, 2.1237322e-06
        %v570 = vadd.f32 %v569, 0.00028619796
        %v571 = vmul.f32 %v568, %v570
        %v572 = vadd.f32 %v571, 0.0036580483
        %v573 = vmul.f32 %v568, %v572
        %v574 = vadd.f32 %v573, 0.05243302
        %v575 = vmul.f32 %v568, %v574
        %v576 = vadd.f32 %v575, 0.18741608
        %v577 = vmul.f32 %v568, %v576
        %v578 = vadd.f32 %v577, 1.1283791
        %v579 = vmul.f32 %v526, %v578
        %v580 = vmul.f32 %v568, 3.8918573e-05
        %v581 = vadd.f32 %v580, 0.001143296
        %v582 = vmul.f32 %v568, %v581
        %v583 = vadd.f32 %v582, 0.014752088
        %v584 = vmul.f32 %v568, %v583
        %v585 = vadd.f32 %v584, 0.112945676
        %v586 = vmul.f32 %v568, %v585
        %v587 = vadd.f32 %v586, 0.4994258
        %v588 = vmul.f32 %v568, %v587
        %v589 = vadd.f32 %v588, 1.0
        %v590 = vrcp.pop %v589
        %v591 = vmul.f32 %v589, %v590
        %v592 = vsub.f32 1.0, %v591
        %v593 = vmul.f32 %v590, %v592
        %v594 = vadd.f32 %v590, %v593
        %vm595 = vweird.f32 %v589
        %vm596 = vweird.f32 %v590
        %vm597 = vmor %vm595, %vm596
        %v598 = vsel %vm597, %v590, %v594
        %v599 = vand.u32 2147483647, %v589
        %vm600 = vcmp.eq.f32.partialorder %v599, 8.507059e+37
        %v601 = vand.u32 %v589, 2147483648
        %v602 = vor.u32 1.1754944e-38, %v601
        %v603 = vsel %vm600, %v602, %v598
        %v604 = vmul.f32 %v579, %v603
        %v605 = vmin.f32 %v604, 1.0
        %v606 = vmax.f32 %v605, -1.0
        %v607 = vadd.f32 %v566, 1.0
        %v608 = vadd.f32 %v606, 1.0
        %v609 = vmul.f32 %v523, %v607
        %v610 = vmul.f32 %v524, %v608
        %v611 = vld [vmem:[#allocation3] sm:$0xff]
        %v612 = vpack.c.bf16 %v609, %v609
        %v613 = vpack.c.bf16 %v610, %v610
        %v614 = vld [vmem:[%s347] sm:$0xf]
        %v615 = vld [vmem:[%s347 + $0x4] sm:$0xf]
        %v616 = vld [vmem:[%s347 + $0x8] sm:$0xf]
        %v617 = vld [vmem:[%s347 + $0xc] sm:$0xf]
        %v618 = vld [vmem:[%s347 + $0x10] sm:$0xf]
        %v619 = vld [vmem:[%s347 + $0x14] sm:$0xf]
        %v620 = vld [vmem:[%s347 + $0x18] sm:$0xf]
        %v621 = vld [vmem:[%s347 + $0x1c] sm:$0xf]
        %v622 = vld [vmem:[%s347 + $0x20] sm:$0xf]
        %v623 = vld [vmem:[%s347 + $0x24] sm:$0xf]
        %v624 = vld [vmem:[%s347 + $0x28] sm:$0xf]
        %v625 = vld [vmem:[%s347 + $0x2c] sm:$0xf]
        %v626 = vld [vmem:[%s347 + $0x30] sm:$0xf]
        %v627 = vld [vmem:[%s347 + $0x34] sm:$0xf]
        %v628 = vld [vmem:[%s347 + $0x38] sm:$0xf]
        %v629 = vld [vmem:[%s347 + $0x3c] sm:$0xf]
        %v630 = vld [vmem:[%s347 + $0x40] sm:$0xf]
        %v631 = vld [vmem:[%s347 + $0x44] sm:$0xf]
        %v632 = vld [vmem:[%s347 + $0x48] sm:$0xf]
        %v633 = vld [vmem:[%s347 + $0x4c] sm:$0xf]
        %v634 = vld [vmem:[%s347 + $0x50] sm:$0xf]
        %v635 = vld [vmem:[%s347 + $0x54] sm:$0xf]
        %v636 = vld [vmem:[%s347 + $0x58] sm:$0xf]
        %v637 = vld [vmem:[%s347 + $0x5c] sm:$0xf]
        %v638 = vld [vmem:[%s347 + $0x60] sm:$0xf]
        %v639 = vld [vmem:[%s347 + $0x64] sm:$0xf]
        %v640 = vld [vmem:[%s347 + $0x68] sm:$0xf]
        %v641 = vld [vmem:[%s347 + $0x6c] sm:$0xf]
        %v642 = vld [vmem:[%s347 + $0x70] sm:$0xf]
        %v643 = vld [vmem:[%s347 + $0x74] sm:$0xf]
        %v644 = vld [vmem:[%s347 + $0x78] sm:$0xf]
        %v645 = vld [vmem:[%s347 + $0x7c] sm:$0xf]
        %v678 = vunpack.c.l.b16 %v614
        %v679 = vunpack.c.l.b16 %v615
        %v680 = vunpack.c.l.b16 %v616
        %v681 = vunpack.c.l.b16 %v617
        %v682 = vunpack.c.l.b16 %v618
        %v683 = vunpack.c.l.b16 %v619
        %v684 = vunpack.c.l.b16 %v620
        %v685 = vunpack.c.l.b16 %v621
        %v686 = vunpack.c.l.b16 %v622
        %v687 = vunpack.c.l.b16 %v623
        %v688 = vunpack.c.l.b16 %v624
        %v689 = vunpack.c.l.b16 %v625
        %v690 = vunpack.c.l.b16 %v626
        %v691 = vunpack.c.l.b16 %v627
        %v692 = vunpack.c.l.b16 %v628
        %v693 = vunpack.c.l.b16 %v629
        %v694 = vunpack.c.l.b16 %v630
        %v695 = vunpack.c.l.b16 %v631
        %v696 = vunpack.c.l.b16 %v632
        %v697 = vunpack.c.l.b16 %v633
        %v698 = vunpack.c.l.b16 %v634
        %v699 = vunpack.c.l.b16 %v635
        %v700 = vunpack.c.l.b16 %v636
        %v701 = vunpack.c.l.b16 %v637
        %v702 = vunpack.c.l.b16 %v638
        %v703 = vunpack.c.l.b16 %v639
        %v704 = vunpack.c.l.b16 %v640
        %v705 = vunpack.c.l.b16 %v641
        %v706 = vunpack.c.l.b16 %v642
        %v707 = vunpack.c.l.b16 %v643
        %v708 = vunpack.c.l.b16 %v644
        %v709 = vunpack.c.l.b16 %v645
        %v710 = vpack.c.b16 %v679, %v678
        %v711 = vpack.c.b16 %v681, %v680
        %v712 = vpack.c.b16 %v683, %v682
        %v713 = vpack.c.b16 %v685, %v684
        %v714 = vpack.c.b16 %v687, %v686
        %v715 = vpack.c.b16 %v689, %v688
        %v716 = vpack.c.b16 %v691, %v690
        %v717 = vpack.c.b16 %v693, %v692
        %v718 = vpack.c.b16 %v695, %v694
        %v719 = vpack.c.b16 %v697, %v696
        %v720 = vpack.c.b16 %v699, %v698
        %v721 = vpack.c.b16 %v701, %v700
        %v722 = vpack.c.b16 %v703, %v702
        %v723 = vpack.c.b16 %v705, %v704
        %v724 = vpack.c.b16 %v707, %v706
        %v725 = vpack.c.b16 %v709, %v708
        %742 = vmatpush.bf16.msra.mxu0 %v717
        %743 = vmatpush.bf16.msra.mxu0 %v716
        %744 = vmatpush.bf16.msra.mxu0 %v715
        %745 = vmatpush.bf16.msra.mxu0 %v714
        %746 = vmatpush.bf16.msra.mxu0 %v713
        %747 = vmatpush.bf16.msra.mxu0 %v712
        %748 = vmatpush.bf16.msra.mxu0 %v711
        %749 = vmatpush.bf16.msra.mxu0 %v710
        %750 = vmatmul.bf16.gmra.mxu0 %v612
        %v751 = vpop.f32.mrf.mxu0
        %v752 = vadd.f32 0.0, %v751
        %v753 = vpop.f32.mrf.mxu0
        %754 = vdwg.mxu0
        %755 = vmatpush.bf16.msra.mxu0 %v725
        %756 = vmatpush.bf16.msra.mxu0 %v724
        %757 = vmatpush.bf16.msra.mxu0 %v723
        %758 = vmatpush.bf16.msra.mxu0 %v722
        %759 = vmatpush.bf16.msra.mxu0 %v721
        %760 = vmatpush.bf16.msra.mxu0 %v720
        %761 = vmatpush.bf16.msra.mxu0 %v719
        %762 = vmatpush.bf16.msra.mxu0 %v718
        %763 = vmatmul.bf16.gmra.mxu0 %v613
        %v764 = vpop.f32.mrf.mxu0
        %v765 = vadd.f32 %v752, %v764
        %v766 = vpop.f32.mrf.mxu0
        %767 = vdwg.mxu0
        %v768 = vadd.f32 %v611, %v765
        %769 = vst [vmem:[#allocation3] sm:$0xff] %v768
        // Predicated region
        $region53: #{mlp_forward.1} parent=47 // pred_check
          %p770 = pneg %p349
        $region54: #{mlp_forward.1} parent=47 // pred_check_branch
          %772 = sbr.rel (%p770) target = $region56
        $region55: #{mlp_forward.1} parent=47 // pred_region
          %v773 = vld [vmem:[#allocation3] sm:$0xff]
          %v774 = vld [vmem:[%s6] sm:$0x1]
          %v776 = vperm.slane %v774, 0
          %v778 = vadd.f32 %v773, %v776
          %779 = vst [vmem:[%s327] sm:$0xff] %v778
        $region56: #{mlp_forward.1} parent=47 // pred_fallthru
          _
        %s780 = sand.u32 %s208, 1
        %s781 = scalar_lea.sflag [#allocation5], %s780
        %s782 = sand.u32 %s208, 1
        %s783 = smul.addr %s782, 8
        %s784 = scalar_lea.vmem [#allocation4], %s783
        // Predicated region
        $region57: #{mlp_forward.1} parent=47 // pred_check
          %p785 = pneg %p218
        $region58: #{mlp_forward.1} parent=47 // pred_check_branch
          %787 = sbr.rel (%p785) target = $region60
        $region59: #{mlp_forward.1} parent=47 // pred_region
          %789 = vsyncadd %s781, 0
          %s790 = smul.addr %s25, 8
          %s791 = scalar_lea.hbm %s7, %s790
          %s793 = sshll.u32 %s784, 4
          %s794 = int_to_ptr.vmem [resolvable:$true] %s793
          %s795 = sshll.u32 %s791, 4
          %s796 = int_to_ptr.hbm [resolvable:$true] %s795
          %798 = dma.vmem_to_hbm [thread:$0]  %s794, 128, %s796, %s781
        $region60: #{mlp_forward.1} parent=47 // pred_fallthru
          _
      $region48: #{mlp_forward.1} parent=5 // pred_fallthru
        _
      %p799 = scmp.le.s32.totalorder 2, %s16
      // Predicated region
      $region61: #{mlp_forward.1} parent=5 // pred_check
        %p800 = pneg %p799
      $region62: #{mlp_forward.1} parent=5 // pred_check_branch
        %802 = sbr.rel (%p800) target = $region64
      $region63: #{mlp_forward.1} parent=5 // pred_region
        %s803 = ssub.s32 %s16, 2
        // Predicated region
        $region65: #{mlp_forward.1} parent=63 // pred_check
          %p804 = pneg %p224
        $region66: #{mlp_forward.1} parent=63 // pred_check_branch
          %806 = sbr.rel (%p804) target = $region68
        $region67: #{mlp_forward.1} parent=63 // pred_region
          %s807 = sand.u32 %s209, 1
          %s808 = scalar_lea.sflag [#allocation5], %s807
          %s809 = sand.u32 %s209, 1
          %s810 = smul.addr %s809, 8
          %s811 = scalar_lea.vmem [#allocation4], %s810
          %813 = dma.done %s808, 128
        $region68: #{mlp_forward.1} parent=63 // pred_fallthru
          _
      $region64: #{mlp_forward.1} parent=5 // pred_fallthru
        _
    $region6: #{mlp_forward.1} parent=1 // loop_footer
      %s20 = sadd.s32 1, %s16
    $region7: #{mlp_forward.1} parent=1 // loop_footer_branch
      %15 = sbr.rel target = $region3
    $region8: #{mlp_forward.1} parent=1 // loop_exit
      _
    %814 = vsyncpa [#allocation5], 1
    %s815 = scalar_lea.sflag [#allocation5], 1
    %816 = vsyncpa %s815, 1

</llo_original>
